<compile_context>
chip_gen: v5e
topology: v5e:2x2
jax: 0.10.0
libtpu: 0.0.40
codegen_flags: <defaults>
</compile_context>

<pallas_src>
import functools

import jax
import jax.numpy as jnp
from jax.experimental import pallas as pl
from jax.experimental.pallas import tpu as pltpu


def _mae_loss_kernel(tl_ref, ptl_ref, out_ref, *, normalize_length, batch):
    # tl_ref / ptl_ref: (1, B) full-array blocks in VMEM.
    # out_ref: (1, 1) float32 scalar in SMEM.
    tl = tl_ref[...].astype(jnp.float32)     # in-vreg cast (handles int/bf16 inputs)
    ptl = ptl_ref[...].astype(jnp.float32)
    adiff = jnp.abs(tl - ptl)

    abs_sum = jnp.sum(adiff)
    if normalize_length:
        out_ref[0, 0] = abs_sum / jnp.sum(tl)
    else:
        out_ref[0, 0] = abs_sum / jnp.float32(batch)


def mae_loss(token_length, pre_token_length, normalize_length=False):
    """Pallas implementation of the PyTorch mae_loss.forward."""
    assert token_length.shape == pre_token_length.shape
    assert token_length.ndim == 1
    b = token_length.shape[0]

    # Free metadata reshape to 2-D (lane-major) for the kernel; no padding.
    tl = token_length.reshape(1, b)
    ptl = pre_token_length.reshape(1, b)

    kernel = functools.partial(
        _mae_loss_kernel,
        normalize_length=normalize_length,
        batch=b,
    )

    cost = pl.CostEstimate(
        flops=3 * b,
        transcendentals=0,
        bytes_accessed=b * (tl.dtype.itemsize + ptl.dtype.itemsize) + 4,
    )

    out = pl.pallas_call(
        kernel,
        out_shape=jax.ShapeDtypeStruct((1, 1), jnp.float32),
        in_specs=[
            pl.BlockSpec(memory_space=pltpu.MemorySpace.VMEM),
            pl.BlockSpec(memory_space=pltpu.MemorySpace.VMEM),
        ],
        out_specs=pl.BlockSpec(memory_space=pltpu.MemorySpace.SMEM),
        cost_estimate=cost,
    )(tl, ptl)
    return out[0, 0]


if __name__ == "__main__":
    key = jax.random.PRNGKey(0)
    k1, k2 = jax.random.split(key)

    B = 8
    # Ground-truth token counts (integers, cast to float as in the CIF predictor).
    token_length = jax.random.randint(k1, (B,), minval=1, maxval=20).astype(
        jnp.float32
    )
    # Predicted (continuous) token counts.
    pre_token_length = token_length + jax.random.normal(k2, (B,), dtype=jnp.float32)

    loss = jax.block_until_ready(
        mae_loss(token_length, pre_token_length, normalize_length=False)
    )
    ref = jnp.sum(jnp.abs(token_length - pre_token_length)) / B
    assert jnp.allclose(loss, ref, rtol=1e-6, atol=1e-6), (loss, ref)

    loss_norm = jax.block_until_ready(
        mae_loss(token_length, pre_token_length, normalize_length=True)
    )
    ref_norm = jnp.sum(jnp.abs(token_length - pre_token_length)) / jnp.sum(
        token_length
    )
    assert jnp.allclose(loss_norm, ref_norm, rtol=1e-6, atol=1e-6), (
        loss_norm,
        ref_norm,
    )

    print("KERNEL_OK")
</pallas_src>

<mosaic_0001>
module attributes {stable_mosaic.version = 11 : i64} {
  func.func @_mae_loss_kernel(%arg0: memref<1x8xf32, #tpu.memory_space<vmem>>, %arg1: memref<1x8xf32, #tpu.memory_space<vmem>>, %arg2: memref<1x1xf32, #tpu.memory_space<smem>>) attributes {dimension_semantics = [], scalar_prefetch = 0 : i64, scratch_operands = 0 : i64, tpu.core_type = #tpu.core_type<tc>} {
    %c0 = arith.constant 0 : index
    %c0_0 = arith.constant 0 : index
    %0 = vector.load %arg0[%c0, %c0_0] : memref<1x8xf32, #tpu.memory_space<vmem>>, vector<1x8xf32>
    %c0_1 = arith.constant 0 : index
    %c0_2 = arith.constant 0 : index
    %1 = vector.load %arg1[%c0_1, %c0_2] : memref<1x8xf32, #tpu.memory_space<vmem>>, vector<1x8xf32>
    %2 = arith.subf %0, %1 : vector<1x8xf32>
    %3 = math.absf %2 : vector<1x8xf32>
    %4 = vector.shape_cast %3 : vector<1x8xf32> to vector<1x1x8xf32>
    %cst = arith.constant dense<0.000000e+00> : vector<1xf32>
    %5 = vector.multi_reduction <add>, %4, %cst [1, 2] : vector<1x1x8xf32> to vector<1xf32>
    %6 = vector.shape_cast %5 : vector<1xf32> to vector<1x1x1xf32>
    %7 = vector.extract %6[0, 0, 0] : f32 from vector<1x1x1xf32>
    %cst_3 = arith.constant 8.000000e+00 : f32
    %8 = arith.divf %7, %cst_3 : f32
    %c0_4 = arith.constant 0 : index
    %c0_5 = arith.constant 0 : index
    %9 = memref.load %arg2[%c0_4, %c0_5] : memref<1x1xf32, #tpu.memory_space<smem>>
    memref.store %8, %arg2[%c0_4, %c0_5] : memref<1x1xf32, #tpu.memory_space<smem>>
    return
  }
}

</mosaic_0001>

<llo_original>
// kernel: tpu_custom_call.1
$region0: #{tpu_custom_call.1}
  #allocation0 [shape = 'u32[]', space=smem, size = 0x4, offset = 0x4, fixed_abs, tag = 'smem constant byte address 0x4 - core index']
  #allocation1 [shape = 'u32[72,128]{1,0:T(1,128)}', space=vmem, size = 0x9000, scoped, tag = 'internal scratch']
  %s0 = inlined_call_operand.hbm [shape: f32[1,8], index: 0, kind: input, shape index: {}]
  %s1 = inlined_call_operand.hbm [shape: f32[1,8], index: 1, kind: input, shape index: {}]
  %s2 = inlined_call_operand.hbm [shape: f32[1,1], index: 2, kind: output, shape index: {}]
  %s3 = sld [smem:[#allocation0]]
  $region26: #{tpu_custom_call.1} parent=0
    _
  %s5 = ssub.s32 1, %s3
  %s6 = scalar_select 0, %s5, %s3
  $region1: #{tpu_custom_call.1} parent=0
    #allocation2 [shape = 'u8[512]{0}', space=vmem, size = 0x400, scoped, tag = 'input window, operand 0, single buffered']
    #allocation3 [shape = 's32[1]{0}', space=sflag, size = 0x4, scoped, tag = 'scoped memory for tpu_custom_call.1']
    #allocation4 [shape = 's32[1]{0}', space=sflag, size = 0x4, scoped, tag = 'scoped memory for tpu_custom_call.1']
    #allocation5 [shape = 'u8[512]{0}', space=vmem, size = 0x400, scoped, tag = 'input window, operand 1, single buffered']
    #allocation6 [shape = 's32[1]{0}', space=sflag, size = 0x4, scoped, tag = 'scoped memory for tpu_custom_call.1']
    #allocation7 [shape = 'u8[512]{0}', space=smem, size = 0x200, scoped, tag = 'output window, operand 0, single buffered']
    %7 = vsyncpa [#allocation3], 0
    %8 = vsyncpa [#allocation6], 0
    %9 = vsyncpa [#allocation4], 0
    // Predicated region
    $region2: #{tpu_custom_call.1} parent=1 // pred_check
      _
    $region3: #{tpu_custom_call.1} parent=1 // pred_check_branch
      %11 = sbr.rel (0) target = $region5
    $region4: #{tpu_custom_call.1} parent=1 // pred_region
      %13 = vsyncadd [#allocation3], 0
      %s15 = sshll.u32 %s0, 4
      %s16 = int_to_ptr.hbm [resolvable:$true] %s15
      %s17 = sshll.u32 [#allocation2], 4
      %s18 = int_to_ptr.vmem [resolvable:$true] %s17
      %20 = dma.hbm_to_vmem [thread:$0]  %s16, 16, %s18, [#allocation3]
    $region5: #{tpu_custom_call.1} parent=1 // pred_fallthru
      _
    // Predicated region
    $region6: #{tpu_custom_call.1} parent=1 // pred_check
      _
    $region7: #{tpu_custom_call.1} parent=1 // pred_check_branch
      %22 = sbr.rel (0) target = $region9
    $region8: #{tpu_custom_call.1} parent=1 // pred_region
      %24 = vsyncadd [#allocation6], 0
      %s26 = sshll.u32 %s1, 4
      %s27 = int_to_ptr.hbm [resolvable:$true] %s26
      %s28 = sshll.u32 [#allocation5], 4
      %s29 = int_to_ptr.vmem [resolvable:$true] %s28
      %31 = dma.hbm_to_vmem [thread:$0]  %s27, 16, %s29, [#allocation6]
    $region9: #{tpu_custom_call.1} parent=1 // pred_fallthru
      _
    // Predicated region
    $region10: #{tpu_custom_call.1} parent=1 // pred_check
      _
    $region11: #{tpu_custom_call.1} parent=1 // pred_check_branch
      %33 = sbr.rel (0) target = $region13
    $region12: #{tpu_custom_call.1} parent=1 // pred_region
      %35 = dma.done [#allocation3], 16
    $region13: #{tpu_custom_call.1} parent=1 // pred_fallthru
      _
    // Predicated region
    $region14: #{tpu_custom_call.1} parent=1 // pred_check
      _
    $region15: #{tpu_custom_call.1} parent=1 // pred_check_branch
      %37 = sbr.rel (0) target = $region17
    $region16: #{tpu_custom_call.1} parent=1 // pred_region
      %39 = dma.done [#allocation6], 16
    $region17: #{tpu_custom_call.1} parent=1 // pred_fallthru
      _
    %v40 = vld [vmem:[#allocation2] sm:$0x1]
    %v41 = vld [vmem:[#allocation5] sm:$0x1]
    %v42 = vsub.f32 %v40, %v41
    %v43 = vand.u32 2147483647, %v42
    %vm44 = vcmask 57344
    %v45 = vsel %vm44, %v43, 0.0
    %46 = vadd.xlane.f32.xlu0 %v45
    %v47 = vpop.xlane.xlu0 %46
    %v48 = vrot.slane %v47, 4
    %v49 = vadd.f32 %v47, %v48
    %v50 = vrot.slane %v49, 2
    %v51 = vadd.f32 %v49, %v50
    %v52 = vrot.slane %v51, 1
    %v53 = vadd.f32 %v51, %v52
    %s54 = vtos %v53
    %v55 = vrcp.pop 8.0
    %v56 = vmul.f32 8.0, %v55
    %v57 = vsub.f32 1.0, %v56
    %v58 = vmul.f32 %v55, %v57
    %v59 = vadd.f32 %v55, %v58
    %vm60 = vweird.f32 %v55
    %v61 = vsel %vm60, %v55, %v59
    %s62 = vtos %v61
    %s63 = smul.f32 %s54, %s62
    %s64 = scalar_lea.smem [#allocation7], 0
    %65 = sst [smem:[%s64]] %s63
    // Predicated region
    $region18: #{tpu_custom_call.1} parent=1 // pred_check
      _
    $region19: #{tpu_custom_call.1} parent=1 // pred_check_branch
      %67 = sbr.rel (0) target = $region21
    $region20: #{tpu_custom_call.1} parent=1 // pred_region
      %69 = vsyncadd [#allocation4], 0
      %s71 = sshll.u32 %s2, 4
      %s72 = int_to_ptr.hbm [resolvable:$true] %s71
      %74 = dma.smem_to_hbm [#allocation7], 16, %s72, [#allocation4]
    $region21: #{tpu_custom_call.1} parent=1 // pred_fallthru
      _
    // Predicated region
    $region22: #{tpu_custom_call.1} parent=1 // pred_check
      _
    $region23: #{tpu_custom_call.1} parent=1 // pred_check_branch
      %76 = sbr.rel (0) target = $region25
    $region24: #{tpu_custom_call.1} parent=1 // pred_region
      %78 = dma.done [#allocation4], 16
    $region25: #{tpu_custom_call.1} parent=1 // pred_fallthru
      _
    %79 = sfence
    %80 = vsyncpa [#allocation3], 1
    %81 = vsyncpa [#allocation6], 1
    %82 = vsyncpa [#allocation4], 1

</llo_original>
